<compile_context>
chip_gen: v7x
topology: tpu7x:2x2x1
jax: 0.10.0
libtpu: 0.0.40
codegen_flags: <defaults>
</compile_context>

<pallas_src>
import functools
import re

import jax
import jax.numpy as jnp
from jax.experimental import pallas as pl
from jax.experimental.pallas import tpu as pltpu

TEMPERATURE = 3.0
ALPHA = 0.7
BETA = 0.3
LABEL_SMOOTHING = 0.1
IGNORE_INDEX = 2

_OUT_SUB = 8     # sublane-aligned partial-output block
_OUT_LANE = 128  # lane-aligned partial-output block


def _distill_loss_kernel(s_ref, t_ref, tgt_ref,
                         kl_out, ce_out, cnt_out,
                         kl_acc, ce_acc, cnt_acc, *maybe_ones,
                         temperature, label_smoothing, ignore_index,
                         use_mxu_rowsum, use_third_exp):
    i = pl.program_id(1)
    ones_ref = maybe_ones[0] if use_mxu_rowsum else None

    @pl.when(i == 0)
    def _():
        kl_acc[...] = jnp.zeros_like(kl_acc)
        ce_acc[...] = jnp.zeros_like(ce_acc)
        cnt_acc[...] = jnp.zeros_like(cnt_acc)
        if use_mxu_rowsum:
            ones_ref[...] = jnp.ones_like(ones_ref)

    s = s_ref[...].astype(jnp.float32)          # (tile, V) student logits
    t = t_ref[...].astype(jnp.float32)          # (tile, V) teacher logits
    tgt = tgt_ref[...]                          # (tile, 1) int32 targets
    valid = (tgt != ignore_index).astype(jnp.float32)   # (tile, 1)

    inv_t = 1.0 / temperature
    vocab = s.shape[-1]

    if use_mxu_rowsum:
        # Offload lane-axis reductions to the MXU (free VLIW slot): X @ ones
        # and read column 0.  Enable only after an accuracy check — MXU matmul
        # precision may round operands relative to an exact f32 VPU/XLU sum.
        ones_mat = ones_ref[...]

        def rowsum(x):
            return jnp.dot(x, ones_mat,
                           preferred_element_type=jnp.float32)[:, 0:1]
    else:
        def rowsum(x):
            return jnp.sum(x, axis=-1, keepdims=True)

    # Shared row maxima: max(x/T) == max(x)/T for T > 0.
    m_s = jnp.max(s, axis=-1, keepdims=True)
    m_t = jnp.max(t, axis=-1, keepdims=True)

    # Teacher side — compute diff once and consume it immediately so e_tt/diff
    # don't stay live together with the student temporaries.
    e_tt = jnp.exp((t - m_t) * inv_t)           # exp((t - m_t) / T)
    diff = t - s
    dot_ts = rowsum(e_tt * diff)                # sum_v e_tt * (t - s)
    z_tt = rowsum(e_tt)

    # Student side at temperature T.
    e_st = jnp.exp((s - m_s) * inv_t)           # exp((s - m_s) / T)
    z_st = rowsum(e_st)

    # Student side at temperature 1: exp(s - m_s) = e_st ** T.  On VALU-bound
    # chips (v7x) spend a third EUP exp; on HBM-bound v5e/v6e keep the cheap
    # integer-power multiply chain.
    t_int = int(temperature)
    if (not use_third_exp) and float(temperature) == float(t_int) and 1 <= t_int <= 8:
        e_s = e_st
        for _ in range(t_int - 1):
            e_s = e_s * e_st
    else:
        e_s = jnp.exp(s - m_s)
    z_s = rowsum(e_s)

    lse_st = m_s * inv_t + jnp.log(z_st)        # logsumexp(s / T)
    lse_tt = m_t * inv_t + jnp.log(z_tt)        # logsumexp(t / T)
    lse_s = m_s + jnp.log(z_s)                  # logsumexp(s)

    # ---- KL(teacher || student) at temperature T (row sums) ----
    # sum_v p_t * (log p_t - log p_s)
    #   = sum_v p_t * (t - s) / T + lse(s/T) - lse(t/T),   p_t = e_tt / z_tt
    kl_row = dot_ts * inv_t / z_tt + lse_st - lse_tt        # (tile, 1)

    # ---- Label-smoothed cross entropy (unscaled student logits) ----
    #   nll    = lse(s) - s[target]
    #   smooth = lse(s) - mean(s)
    # where-select gather: no one-hot cast + multiply.  The lane iota is a
    # single cheap lane-iota op per block; hoisting it to a VMEM scratch would
    # cost a whole extra (tile, V) block, so it is regenerated.
    lane = jax.lax.broadcasted_iota(jnp.int32, s.shape, 1)
    s_tgt = rowsum(jnp.where(lane == tgt, s, 0.0))
    s_mean = rowsum(s) * (1.0 / vocab)
    nll = lse_s - s_tgt
    smooth = lse_s - s_mean
    ce_row = (1.0 - label_smoothing) * nll + label_smoothing * smooth

    kl_acc[...] += jnp.sum(kl_row * valid)
    ce_acc[...] += jnp.sum(ce_row * valid)
    cnt_acc[...] += jnp.sum(valid)

    @pl.when(i == pl.num_programs(1) - 1)
    def _():
        kl_out[...] = jnp.broadcast_to(kl_acc[...], kl_out.shape)
        ce_out[...] = jnp.broadcast_to(ce_acc[...], ce_out.shape)
        cnt_out[...] = jnp.broadcast_to(cnt_acc[...], cnt_out.shape)


def _tpu_generation():
    try:
        kind = str(jax.devices()[0].device_kind)
    except Exception:
        return 0
    m = re.search(r"(\d+)", kind)
    return int(m.group(1)) if m else 0


def _round_up(x, m):
    return (x + m - 1) // m * m


def improved_distillation_loss(student_logits, teacher_logits, hard_targets,
                               temperature=TEMPERATURE, alpha=ALPHA, beta=BETA,
                               label_smoothing=LABEL_SMOOTHING,
                               ignore_index=IGNORE_INDEX,
                               tile_rows=None, num_core_splits=2,
                               core_semantics=None, use_mxu_rowsum=None,
                               input_buffer_count=2):
    B, S, V = student_logits.shape
    N = B * S

    # Keep the caller's dtype (e.g. bf16) through the pallas_call to halve HBM
    # traffic; the kernel casts to f32 internally.
    # TODO(synk): on HBM-bound v5e, casting f32 logits to bf16 here (inputs
    # only; kernel math stays f32) halves bytes moved (~2x wall) — enable only
    # after an accuracy check against the training tolerance.
    s = student_logits.reshape(N, V)
    t = teacher_logits.reshape(N, V)
    tg = hard_targets.reshape(N, 1).astype(jnp.int32)

    in_bytes = jnp.dtype(s.dtype).itemsize
    gen = _tpu_generation()

    # ---- per-generation VMEM budget ----
    vmem_phys = (64 << 20) if (gen >= 7 or gen == 0) else (128 << 20)
    try:  # prefer the real hardware number when available
        info = pltpu.get_tpu_info()
        vmem_phys = int(getattr(info, "vmem_capacity_bytes", vmem_phys))
    except Exception:
        pass
    # v5e/v6e (128 MiB) -> ~102 MiB scoped limit; v7x (64 MiB) -> ~51 MiB,
    # leaving headroom for compiler scratch.
    vmem_cap = int(min(0.8 * vmem_phys, vmem_phys - (12 << 20)))

    # MXU row-reduction offload: the (V, 128) f32 ones matrix must stay small.
    mxu_ok = (V * 128 * 4) <= (2 << 20)          # V <= 4096
    if use_mxu_rowsum is None:
        use_mxu_rowsum = mxu_ok and gen >= 7     # VALU-bound chips by default
    else:
        use_mxu_rowsum = bool(use_mxu_rowsum) and mxu_ok
    ones_bytes = V * 128 * 4 if use_mxu_rowsum else 0

    # On v7x EUP has slack while VALU is the tight slot: use a third exp pass
    # instead of the integer-power multiply chain.
    use_third_exp = gen >= 7
    # TODO(synk): optional bf16 pre-exp elementwise math on v6e/v7x (f32 sums)
    # would double VALU throughput; gate behind an accuracy check.

    # ---- tile selection (counts actual live temporaries) ----
    # pipeline: 2 logits inputs x 2 (or input_buffer_count) buffers; f32 temps:
    # s, t, diff, e_tt, e_st, e_s, where-select  (~7 full-vocab rows at peak).
    nbuf = max(2, int(input_buffer_count))
    per_row_bytes = V * (2 * nbuf * in_bytes + 7 * 4)
    margin = 2 << 20

    if num_core_splits < 1:
        num_core_splits = 1
    if N < 8 * num_core_splits:
        num_core_splits = 1
    rows_per_split_min = pl.cdiv(N, num_core_splits)

    if tile_rows is None:
        # target ~4 MiB per input block (amortizes the ~0.35us/step overhead on
        # small vocabularies) subject to the VMEM budget.
        tile_from_block = max(8, ((4 << 20) // (V * in_bytes)) // 8 * 8)
        tile_from_vmem = max(8, ((vmem_cap - ones_bytes - margin)
                                 // per_row_bytes) // 8 * 8)
        tile = min(tile_from_block, tile_from_vmem)
    else:
        tile = max(8, int(tile_rows) // 8 * 8)
    tile = min(tile, _round_up(rows_per_split_min, 8))
    # TODO(synk): for very large vocabularies (V >= ~128K even tile=8 blows
    # VMEM) add a vocab grid axis with a streaming/online logsumexp.

    # Pad rows (zero logits, ignore_index targets) instead of degenerating to a
    # single full-extent block when N is not a multiple of the tiling.
    rows_per_split = _round_up(rows_per_split_min, tile)
    n_pad = rows_per_split * num_core_splits
    if n_pad > N:
        extra = n_pad - N
        s = jnp.concatenate([s, jnp.zeros((extra, V), s.dtype)], axis=0)
        t = jnp.concatenate([t, jnp.zeros((extra, V), t.dtype)], axis=0)
        tg = jnp.concatenate(
            [tg, jnp.full((extra, 1), ignore_index, jnp.int32)], axis=0)
    inner = rows_per_split // tile

    vmem_need = per_row_bytes * tile + ones_bytes + margin
    vmem_limit = int(min(max(vmem_need, 32 << 20), vmem_cap))

    kernel = functools.partial(
        _distill_loss_kernel,
        temperature=float(temperature),
        label_smoothing=float(label_smoothing),
        ignore_index=int(ignore_index),
        use_mxu_rowsum=use_mxu_rowsum,
        use_third_exp=use_third_exp,
    )

    def row_block(c, i):
        return (c * inner + i, 0)

    # Extra pipeline buffers for the logit inputs only when explicitly asked
    # for (e.g. v5e with exposed DMA at tile boundaries).
    logit_kwargs = {}
    if nbuf != 2:
        logit_kwargs = dict(pipeline_mode=pl.Buffered(nbuf))

    part_shape = jax.ShapeDtypeStruct((num_core_splits * _OUT_SUB, _OUT_LANE),
                                      jnp.float32)
    part_spec = pl.BlockSpec((_OUT_SUB, _OUT_LANE), lambda c, i: (c, 0))

    scratch = [pltpu.VMEM((1, 1), jnp.float32),
               pltpu.VMEM((1, 1), jnp.float32),
               pltpu.VMEM((1, 1), jnp.float32)]
    if use_mxu_rowsum:
        scratch.append(pltpu.VMEM((V, 128), jnp.float32))

    # Leading grid axis splits rows across TensorCores.  On v7x request
    # CORE_PARALLEL (only core-parallel semantics change codegen); everywhere
    # else plain "parallel" is the documented safe path.
    if core_semantics is None:
        core_par = getattr(pltpu, "CORE_PARALLEL", None)
        lead_sem = (core_par if (gen >= 7 and num_core_splits > 1
                                 and core_par is not None) else "parallel")
    else:
        lead_sem = core_semantics

    def _call(lead):
        arb = "arbitrary" if isinstance(lead, str) else getattr(
            pltpu, "ARBITRARY", "arbitrary")
        return pl.pallas_call(
            kernel,
            out_shape=(part_shape, part_shape, part_shape),
            grid_spec=pltpu.PrefetchScalarGridSpec(
                num_scalar_prefetch=0,
                grid=(num_core_splits, inner),
                in_specs=[
                    pl.BlockSpec((tile, V), row_block, **logit_kwargs),
                    pl.BlockSpec((tile, V), row_block, **logit_kwargs),
                    pl.BlockSpec((tile, 1), row_block),
                ],
                out_specs=(part_spec, part_spec, part_spec),
                scratch_shapes=scratch,
            ),
            compiler_params=pltpu.CompilerParams(
                dimension_semantics=(lead, arb),
                vmem_limit_bytes=vmem_limit,
            ),
        )(s, t, tg)

    if lead_sem == "parallel":
        kl_p, ce_p, cnt_p = _call("parallel")
    else:
        try:
            kl_p, ce_p, cnt_p = _call(lead_sem)
        except Exception:
            # TODO(synk): confirm CORE_PARALLEL semantics on real v7x hardware.
            kl_p, ce_p, cnt_p = _call("parallel")

    def _collect(p):
        return jnp.sum(p.reshape(num_core_splits, _OUT_SUB, _OUT_LANE)[:, 0, 0])

    kl_sum = _collect(kl_p)
    ce_sum = _collect(ce_p)
    count = _collect(cnt_p)
    denom = jnp.maximum(count, 1.0)

    # PyTorch masks the rows *before* KLDivLoss(reduction='batchmean'), so the
    # batchmean denominator is the valid-row count — matched here.
    distillation_loss = (kl_sum / denom) * (temperature ** 2)
    hard_loss = ce_sum / denom
    total_loss = alpha * distillation_loss + beta * hard_loss

    # TODO(synk): PyTorch returns a single scalar 0.0 tensor when no token is
    # valid (mask.sum()==0); here we keep the 3-tuple shape and zero the values.
    has_valid = (count > 0).astype(jnp.float32)
    return (total_loss * has_valid,
            distillation_loss * has_valid,
            hard_loss * has_valid)


def _reference(student_logits, teacher_logits, hard_targets,
               temperature=TEMPERATURE, alpha=ALPHA, beta=BETA,
               label_smoothing=LABEL_SMOOTHING, ignore_index=IGNORE_INDEX):
    B, S, V = student_logits.shape
    s = student_logits.reshape(-1, V).astype(jnp.float32)
    t = teacher_logits.reshape(-1, V).astype(jnp.float32)
    tg = hard_targets.reshape(-1)
    mask = (tg != ignore_index).astype(jnp.float32)
    count = jnp.maximum(jnp.sum(mask), 1.0)

    st_ls = jax.nn.log_softmax(s / temperature, axis=-1)
    tt_ls = jax.nn.log_softmax(t / temperature, axis=-1)
    p_t = jnp.exp(tt_ls)
    kl_rows = jnp.sum(p_t * (tt_ls - st_ls), axis=-1)
    distill = jnp.sum(kl_rows * mask) / count * temperature ** 2

    ls = jax.nn.log_softmax(s, axis=-1)
    nll = -jnp.take_along_axis(ls, tg[:, None], axis=-1)[:, 0]
    smooth = -jnp.mean(ls, axis=-1)
    ce_rows = (1 - label_smoothing) * nll + label_smoothing * smooth
    hard = jnp.sum(ce_rows * mask) / count

    total = alpha * distill + beta * hard
    return total, distill, hard


if __name__ == "__main__":
    key = jax.random.PRNGKey(0)
    k1, k2, k3 = jax.random.split(key, 3)

    B, S, V = 2, 8, 128  # small shapes; vocab multiple of 128 (lane dim)
    student = jax.random.normal(k1, (B, S, V), dtype=jnp.float32)
    teacher = jax.random.normal(k2, (B, S, V), dtype=jnp.float32)
    targets = jax.random.randint(k3, (B, S), 0, V, dtype=jnp.int32)
    # sprinkle some ignore_index tokens to exercise masking
    targets = targets.at[0, 0].set(IGNORE_INDEX)
    targets = targets.at[1, 3].set(IGNORE_INDEX)

    total, distill, hard = improved_distillation_loss(student, teacher, targets)
    jax.block_until_ready((total, distill, hard))

    ref_total, ref_distill, ref_hard = _reference(student, teacher, targets)
    assert jnp.allclose(total, ref_total, rtol=1e-4, atol=1e-5), (total, ref_total)
    assert jnp.allclose(distill, ref_distill, rtol=1e-4, atol=1e-5), (distill, ref_distill)
    assert jnp.allclose(hard, ref_hard, rtol=1e-4, atol=1e-5), (hard, ref_hard)

    # Exercise the MXU row-reduction path (looser tolerance: MXU matmul
    # precision mode may round the summands relative to an exact f32 sum).
    mx = improved_distillation_loss(student, teacher, targets,
                                    use_mxu_rowsum=True)
    jax.block_until_ready(mx)
    assert jnp.allclose(mx[0], ref_total, rtol=2e-2, atol=1e-3), (mx[0], ref_total)

    # Exercise the row-padding path (N not a multiple of 8).
    B2, S2 = 1, 5
    st2 = jax.random.normal(k1, (B2, S2, V), dtype=jnp.float32)
    te2 = jax.random.normal(k2, (B2, S2, V), dtype=jnp.float32)
    tg2 = jax.random.randint(k3, (B2, S2), 0, V, dtype=jnp.int32)
    o2 = improved_distillation_loss(st2, te2, tg2)
    jax.block_until_ready(o2)
    r2 = _reference(st2, te2, tg2)
    assert jnp.allclose(o2[0], r2[0], rtol=1e-4, atol=1e-5), (o2[0], r2[0])
    assert jnp.allclose(o2[1], r2[1], rtol=1e-4, atol=1e-5), (o2[1], r2[1])
    assert jnp.allclose(o2[2], r2[2], rtol=1e-4, atol=1e-5), (o2[2], r2[2])

    print("KERNEL_OK")
</pallas_src>

<mosaic_0001>
module attributes {stable_mosaic.version = 11 : i64} {
  func.func @_distill_loss_kernel(%arg0: i32, %arg1: i32, %arg2: memref<8x128xf32, #tpu.memory_space<vmem>>, %arg3: memref<8x128xf32, #tpu.memory_space<vmem>>, %arg4: memref<8x1xi32, #tpu.memory_space<vmem>>, %arg5: memref<8x128xf32, #tpu.memory_space<vmem>>, %arg6: memref<8x128xf32, #tpu.memory_space<vmem>>, %arg7: memref<8x128xf32, #tpu.memory_space<vmem>>, %arg8: memref<1x1xf32, #tpu.memory_space<vmem>>, %arg9: memref<1x1xf32, #tpu.memory_space<vmem>>, %arg10: memref<1x1xf32, #tpu.memory_space<vmem>>) attributes {dimension_semantics = [#tpu.dimension_semantics<parallel>, #tpu.dimension_semantics<arbitrary>], iteration_bounds = array<i64: 2, 1>, scalar_prefetch = 0 : i64, scratch_operands = 3 : i64, tpu.core_type = #tpu.core_type<tc>, window_params = [{transform_indices = @transform_0, window_bounds = array<i64: 8, 128>}, {transform_indices = @transform_1, window_bounds = array<i64: 8, 128>}, {transform_indices = @transform_2, window_bounds = array<i64: 8, 1>}, {transform_indices = @transform_3, window_bounds = array<i64: 8, 128>}, {transform_indices = @transform_4, window_bounds = array<i64: 8, 128>}, {transform_indices = @transform_5, window_bounds = array<i64: 8, 128>}]} {
    %c0_i32 = arith.constant 0 : i32
    %0 = arith.cmpi eq, %arg1, %c0_i32 : i32
    %1 = arith.extui %0 : i1 to i32
    %c0_i32_0 = arith.constant 0 : i32
    %2 = arith.cmpi ne, %1, %c0_i32_0 : i32
    scf.if %2 {
      %cst_39 = arith.constant 0.000000e+00 : f32
      %98 = vector.broadcast %cst_39 : f32 to vector<1x1xf32>
      %c0_40 = arith.constant 0 : index
      %c0_41 = arith.constant 0 : index
      %99 = vector.load %arg8[%c0_40, %c0_41] : memref<1x1xf32, #tpu.memory_space<vmem>>, vector<1x1xf32>
      tpu.vector_store %arg8[%c0_40, %c0_41], %98 {strides = array<i32>} : memref<1x1xf32, #tpu.memory_space<vmem>>, vector<1x1xf32>,
      %cst_42 = arith.constant 0.000000e+00 : f32
      %100 = vector.broadcast %cst_42 : f32 to vector<1x1xf32>
      %c0_43 = arith.constant 0 : index
      %c0_44 = arith.constant 0 : index
      %101 = vector.load %arg9[%c0_43, %c0_44] : memref<1x1xf32, #tpu.memory_space<vmem>>, vector<1x1xf32>
      tpu.vector_store %arg9[%c0_43, %c0_44], %100 {strides = array<i32>} : memref<1x1xf32, #tpu.memory_space<vmem>>, vector<1x1xf32>,
      %cst_45 = arith.constant 0.000000e+00 : f32
      %102 = vector.broadcast %cst_45 : f32 to vector<1x1xf32>
      %c0_46 = arith.constant 0 : index
      %c0_47 = arith.constant 0 : index
      %103 = vector.load %arg10[%c0_46, %c0_47] : memref<1x1xf32, #tpu.memory_space<vmem>>, vector<1x1xf32>
      tpu.vector_store %arg10[%c0_46, %c0_47], %102 {strides = array<i32>} : memref<1x1xf32, #tpu.memory_space<vmem>>, vector<1x1xf32>,
    } else {
    }
    %c0 = arith.constant 0 : index
    %c0_1 = arith.constant 0 : index
    %3 = vector.load %arg2[%c0, %c0_1] : memref<8x128xf32, #tpu.memory_space<vmem>>, vector<8x128xf32>
    %c0_2 = arith.constant 0 : index
    %c0_3 = arith.constant 0 : index
    %4 = vector.load %arg3[%c0_2, %c0_3] : memref<8x128xf32, #tpu.memory_space<vmem>>, vector<8x128xf32>
    %c0_4 = arith.constant 0 : index
    %c0_5 = arith.constant 0 : index
    %5 = vector.load %arg4[%c0_4, %c0_5] : memref<8x1xi32, #tpu.memory_space<vmem>>, vector<8x1xi32>
    %c2_i32 = arith.constant 2 : i32
    %6 = vector.broadcast %c2_i32 : i32 to vector<8x1xi32>
    %7 = arith.cmpi ne, %5, %6 : vector<8x1xi32>
    %8 = arith.extui %7 : vector<8x1xi1> to vector<8x1xi32>
    %9 = arith.sitofp %8 : vector<8x1xi32> to vector<8x1xf32>
    %cst = arith.constant dense<0xFF800000> : vector<8xf32>
    %10 = vector.multi_reduction <maximumf>, %3, %cst [1] : vector<8x128xf32> to vector<8xf32>
    %11 = vector.shape_cast %10 : vector<8xf32> to vector<8x1xf32>
    %cst_6 = arith.constant dense<0xFF800000> : vector<8xf32>
    %12 = vector.multi_reduction <maximumf>, %4, %cst_6 [1] : vector<8x128xf32> to vector<8xf32>
    %13 = vector.shape_cast %12 : vector<8xf32> to vector<8x1xf32>
    %14 = vector.broadcast %13 : vector<8x1xf32> to vector<8x128xf32>
    %15 = arith.subf %4, %14 : vector<8x128xf32>
    %cst_7 = arith.constant 0.333333343 : f32
    %16 = vector.broadcast %cst_7 : f32 to vector<8x128xf32>
    %17 = arith.mulf %15, %16 : vector<8x128xf32>
    %18 = math.exp %17 : vector<8x128xf32>
    %19 = arith.subf %4, %3 : vector<8x128xf32>
    %20 = arith.mulf %18, %19 : vector<8x128xf32>
    %cst_8 = arith.constant dense<0.000000e+00> : vector<8xf32>
    %21 = vector.multi_reduction <add>, %20, %cst_8 [1] : vector<8x128xf32> to vector<8xf32>
    %22 = vector.shape_cast %21 : vector<8xf32> to vector<8x1xf32>
    %cst_9 = arith.constant dense<0.000000e+00> : vector<8xf32>
    %23 = vector.multi_reduction <add>, %18, %cst_9 [1] : vector<8x128xf32> to vector<8xf32>
    %24 = vector.shape_cast %23 : vector<8xf32> to vector<8x1xf32>
    %25 = vector.broadcast %11 : vector<8x1xf32> to vector<8x128xf32>
    %26 = arith.subf %3, %25 : vector<8x128xf32>
    %cst_10 = arith.constant 0.333333343 : f32
    %27 = vector.broadcast %cst_10 : f32 to vector<8x128xf32>
    %28 = arith.mulf %26, %27 : vector<8x128xf32>
    %29 = math.exp %28 : vector<8x128xf32>
    %cst_11 = arith.constant dense<0.000000e+00> : vector<8xf32>
    %30 = vector.multi_reduction <add>, %29, %cst_11 [1] : vector<8x128xf32> to vector<8xf32>
    %31 = vector.shape_cast %30 : vector<8xf32> to vector<8x1xf32>
    %32 = arith.mulf %29, %29 : vector<8x128xf32>
    %33 = arith.mulf %32, %29 : vector<8x128xf32>
    %cst_12 = arith.constant dense<0.000000e+00> : vector<8xf32>
    %34 = vector.multi_reduction <add>, %33, %cst_12 [1] : vector<8x128xf32> to vector<8xf32>
    %35 = vector.shape_cast %34 : vector<8xf32> to vector<8x1xf32>
    %cst_13 = arith.constant 0.333333343 : f32
    %36 = vector.broadcast %cst_13 : f32 to vector<8x1xf32>
    %37 = arith.mulf %11, %36 : vector<8x1xf32>
    %38 = math.log %31 : vector<8x1xf32>
    %39 = arith.addf %37, %38 : vector<8x1xf32>
    %cst_14 = arith.constant 0.333333343 : f32
    %40 = vector.broadcast %cst_14 : f32 to vector<8x1xf32>
    %41 = arith.mulf %13, %40 : vector<8x1xf32>
    %42 = math.log %24 : vector<8x1xf32>
    %43 = arith.addf %41, %42 : vector<8x1xf32>
    %44 = math.log %35 : vector<8x1xf32>
    %45 = arith.addf %11, %44 : vector<8x1xf32>
    %cst_15 = arith.constant 0.333333343 : f32
    %46 = vector.broadcast %cst_15 : f32 to vector<8x1xf32>
    %47 = arith.mulf %22, %46 : vector<8x1xf32>
    %48 = arith.divf %47, %24 : vector<8x1xf32>
    %49 = arith.addf %48, %39 : vector<8x1xf32>
    %50 = arith.subf %49, %43 : vector<8x1xf32>
    %51 = tpu.iota {dimensions = array<i32: 1>} : vector<8x128xi32>
    %52 = vector.broadcast %5 : vector<8x1xi32> to vector<8x128xi32>
    %53 = arith.cmpi eq, %51, %52 : vector<8x128xi32>
    %cst_16 = arith.constant 0.000000e+00 : f32
    %54 = vector.broadcast %cst_16 : f32 to vector<8x128xf32>
    %55 = arith.select %53, %3, %54 : vector<8x128xi1>, vector<8x128xf32>
    %cst_17 = arith.constant dense<0.000000e+00> : vector<8xf32>
    %56 = vector.multi_reduction <add>, %55, %cst_17 [1] : vector<8x128xf32> to vector<8xf32>
    %57 = vector.shape_cast %56 : vector<8xf32> to vector<8x1xf32>
    %cst_18 = arith.constant dense<0.000000e+00> : vector<8xf32>
    %58 = vector.multi_reduction <add>, %3, %cst_18 [1] : vector<8x128xf32> to vector<8xf32>
    %59 = vector.shape_cast %58 : vector<8xf32> to vector<8x1xf32>
    %cst_19 = arith.constant 7.812500e-03 : f32
    %60 = vector.broadcast %cst_19 : f32 to vector<8x1xf32>
    %61 = arith.mulf %59, %60 : vector<8x1xf32>
    %62 = arith.subf %45, %57 : vector<8x1xf32>
    %63 = arith.subf %45, %61 : vector<8x1xf32>
    %cst_20 = arith.constant 0.899999976 : f32
    %64 = vector.broadcast %cst_20 : f32 to vector<8x1xf32>
    %65 = arith.mulf %64, %62 : vector<8x1xf32>
    %cst_21 = arith.constant 1.000000e-01 : f32
    %66 = vector.broadcast %cst_21 : f32 to vector<8x1xf32>
    %67 = arith.mulf %66, %63 : vector<8x1xf32>
    %68 = arith.addf %65, %67 : vector<8x1xf32>
    %c0_22 = arith.constant 0 : index
    %c0_23 = arith.constant 0 : index
    %69 = vector.load %arg8[%c0_22, %c0_23] : memref<1x1xf32, #tpu.memory_space<vmem>>, vector<1x1xf32>
    %70 = arith.mulf %50, %9 : vector<8x1xf32>
    %71 = vector.shape_cast %70 : vector<8x1xf32> to vector<1x8x1xf32>
    %cst_24 = arith.constant dense<0.000000e+00> : vector<1xf32>
    %72 = vector.multi_reduction <add>, %71, %cst_24 [1, 2] : vector<1x8x1xf32> to vector<1xf32>
    %73 = vector.shape_cast %72 : vector<1xf32> to vector<1x1x1xf32>
    %74 = vector.extract %73[0, 0, 0] : f32 from vector<1x1x1xf32>
    %75 = vector.broadcast %74 : f32 to vector<1x1xf32>
    %76 = arith.addf %69, %75 : vector<1x1xf32>
    %c0_25 = arith.constant 0 : index
    %c0_26 = arith.constant 0 : index
    %77 = vector.load %arg8[%c0_25, %c0_26] : memref<1x1xf32, #tpu.memory_space<vmem>>, vector<1x1xf32>
    tpu.vector_store %arg8[%c0_25, %c0_26], %76 {strides = array<i32>} : memref<1x1xf32, #tpu.memory_space<vmem>>, vector<1x1xf32>,
    %c0_27 = arith.constant 0 : index
    %c0_28 = arith.constant 0 : index
    %78 = vector.load %arg9[%c0_27, %c0_28] : memref<1x1xf32, #tpu.memory_space<vmem>>, vector<1x1xf32>
    %79 = arith.mulf %68, %9 : vector<8x1xf32>
    %80 = vector.shape_cast %79 : vector<8x1xf32> to vector<1x8x1xf32>
    %cst_29 = arith.constant dense<0.000000e+00> : vector<1xf32>
    %81 = vector.multi_reduction <add>, %80, %cst_29 [1, 2] : vector<1x8x1xf32> to vector<1xf32>
    %82 = vector.shape_cast %81 : vector<1xf32> to vector<1x1x1xf32>
    %83 = vector.extract %82[0, 0, 0] : f32 from vector<1x1x1xf32>
    %84 = vector.broadcast %83 : f32 to vector<1x1xf32>
    %85 = arith.addf %78, %84 : vector<1x1xf32>
    %c0_30 = arith.constant 0 : index
    %c0_31 = arith.constant 0 : index
    %86 = vector.load %arg9[%c0_30, %c0_31] : memref<1x1xf32, #tpu.memory_space<vmem>>, vector<1x1xf32>
    tpu.vector_store %arg9[%c0_30, %c0_31], %85 {strides = array<i32>} : memref<1x1xf32, #tpu.memory_space<vmem>>, vector<1x1xf32>,
    %c0_32 = arith.constant 0 : index
    %c0_33 = arith.constant 0 : index
    %87 = vector.load %arg10[%c0_32, %c0_33] : memref<1x1xf32, #tpu.memory_space<vmem>>, vector<1x1xf32>
    %88 = vector.shape_cast %9 : vector<8x1xf32> to vector<1x8x1xf32>
    %cst_34 = arith.constant dense<0.000000e+00> : vector<1xf32>
    %89 = vector.multi_reduction <add>, %88, %cst_34 [1, 2] : vector<1x8x1xf32> to vector<1xf32>
    %90 = vector.shape_cast %89 : vector<1xf32> to vector<1x1x1xf32>
    %91 = vector.extract %90[0, 0, 0] : f32 from vector<1x1x1xf32>
    %92 = vector.broadcast %91 : f32 to vector<1x1xf32>
    %93 = arith.addf %87, %92 : vector<1x1xf32>
    %c0_35 = arith.constant 0 : index
    %c0_36 = arith.constant 0 : index
    %94 = vector.load %arg10[%c0_35, %c0_36] : memref<1x1xf32, #tpu.memory_space<vmem>>, vector<1x1xf32>
    tpu.vector_store %arg10[%c0_35, %c0_36], %93 {strides = array<i32>} : memref<1x1xf32, #tpu.memory_space<vmem>>, vector<1x1xf32>,
    %c0_i32_37 = arith.constant 0 : i32
    %95 = arith.cmpi eq, %arg1, %c0_i32_37 : i32
    %96 = arith.extui %95 : i1 to i32
    %c0_i32_38 = arith.constant 0 : i32
    %97 = arith.cmpi ne, %96, %c0_i32_38 : i32
    scf.if %97 {
      %c0_39 = arith.constant 0 : index
      %c0_40 = arith.constant 0 : index
      %98 = vector.load %arg8[%c0_39, %c0_40] : memref<1x1xf32, #tpu.memory_space<vmem>>, vector<1x1xf32>
      %99 = vector.shape_cast %98 : vector<1x1xf32> to vector<1x1xf32>
      %100 = vector.broadcast %99 : vector<1x1xf32> to vector<8x128xf32>
      %c0_41 = arith.constant 0 : index
      %c0_42 = arith.constant 0 : index
      %101 = vector.load %arg5[%c0_41, %c0_42] : memref<8x128xf32, #tpu.memory_space<vmem>>, vector<8x128xf32>
      tpu.vector_store %arg5[%c0_41, %c0_42], %100 {strides = array<i32>} : memref<8x128xf32, #tpu.memory_space<vmem>>, vector<8x128xf32>,
      %c0_43 = arith.constant 0 : index
      %c0_44 = arith.constant 0 : index
      %102 = vector.load %arg9[%c0_43, %c0_44] : memref<1x1xf32, #tpu.memory_space<vmem>>, vector<1x1xf32>
      %103 = vector.shape_cast %102 : vector<1x1xf32> to vector<1x1xf32>
      %104 = vector.broadcast %103 : vector<1x1xf32> to vector<8x128xf32>
      %c0_45 = arith.constant 0 : index
      %c0_46 = arith.constant 0 : index
      %105 = vector.load %arg6[%c0_45, %c0_46] : memref<8x128xf32, #tpu.memory_space<vmem>>, vector<8x128xf32>
      tpu.vector_store %arg6[%c0_45, %c0_46], %104 {strides = array<i32>} : memref<8x128xf32, #tpu.memory_space<vmem>>, vector<8x128xf32>,
      %c0_47 = arith.constant 0 : index
      %c0_48 = arith.constant 0 : index
      %106 = vector.load %arg10[%c0_47, %c0_48] : memref<1x1xf32, #tpu.memory_space<vmem>>, vector<1x1xf32>
      %107 = vector.shape_cast %106 : vector<1x1xf32> to vector<1x1xf32>
      %108 = vector.broadcast %107 : vector<1x1xf32> to vector<8x128xf32>
      %c0_49 = arith.constant 0 : index
      %c0_50 = arith.constant 0 : index
      %109 = vector.load %arg7[%c0_49, %c0_50] : memref<8x128xf32, #tpu.memory_space<vmem>>, vector<8x128xf32>
      tpu.vector_store %arg7[%c0_49, %c0_50], %108 {strides = array<i32>} : memref<8x128xf32, #tpu.memory_space<vmem>>, vector<8x128xf32>,
    } else {
    }
    return
  }
  func.func @transform_0(%arg0: i32, %arg1: i32) -> (i32, i32) {
    %c1_i32 = arith.constant 1 : i32
    %0 = arith.muli %arg0, %c1_i32 : i32
    %1 = arith.addi %0, %arg1 : i32
    %c0_i32 = arith.constant 0 : i32
    %c0_i32_0 = arith.constant 0 : i32
    return %1, %c0_i32 : i32, i32
  }
  func.func @transform_1(%arg0: i32, %arg1: i32) -> (i32, i32) {
    %c1_i32 = arith.constant 1 : i32
    %0 = arith.muli %arg0, %c1_i32 : i32
    %1 = arith.addi %0, %arg1 : i32
    %c0_i32 = arith.constant 0 : i32
    %c0_i32_0 = arith.constant 0 : i32
    return %1, %c0_i32 : i32, i32
  }
  func.func @transform_2(%arg0: i32, %arg1: i32) -> (i32, i32) {
    %c1_i32 = arith.constant 1 : i32
    %0 = arith.muli %arg0, %c1_i32 : i32
    %1 = arith.addi %0, %arg1 : i32
    %c0_i32 = arith.constant 0 : i32
    %c0_i32_0 = arith.constant 0 : i32
    return %1, %c0_i32 : i32, i32
  }
  func.func @transform_3(%arg0: i32, %arg1: i32) -> (i32, i32) {
    %c0_i32 = arith.constant 0 : i32
    %c0_i32_0 = arith.constant 0 : i32
    return %arg0, %c0_i32 : i32, i32
  }
  func.func @transform_4(%arg0: i32, %arg1: i32) -> (i32, i32) {
    %c0_i32 = arith.constant 0 : i32
    %c0_i32_0 = arith.constant 0 : i32
    return %arg0, %c0_i32 : i32, i32
  }
  func.func @transform_5(%arg0: i32, %arg1: i32) -> (i32, i32) {
    %c0_i32 = arith.constant 0 : i32
    %c0_i32_0 = arith.constant 0 : i32
    return %arg0, %c0_i32 : i32, i32
  }
}

</mosaic_0001>

<llo_original>
// kernel: tpu_custom_call.1
$region0: #{tpu_custom_call.1}
  #allocation0 [shape = 'u32[]', space=smem, size = 0x4, offset = 0x4, fixed_abs, tag = 'smem constant byte address 0x4 - core index']
  #allocation1 [shape = 'u32[144,128]{1,0:T(1,128)}', space=vmem, size = 0x12000, scoped, tag = 'internal scratch']
  #allocation2 [shape = 'f32[1,1]{1,0:T(1,128)}', space=vmem, size = 0x200, scoped, tag = 'scratch operand']
  #allocation3 [shape = 'f32[1,1]{1,0:T(1,128)}', space=vmem, size = 0x200, scoped, tag = 'scratch operand']
  #allocation4 [shape = 'f32[1,1]{1,0:T(1,128)}', space=vmem, size = 0x200, scoped, tag = 'scratch operand']
  %s0 = inlined_call_operand.vmem [shape: f32[16,128], index: 0, kind: input, shape index: {}]
  %s1 = inlined_call_operand.hbm [shape: f32[16,128], index: 1, kind: input, shape index: {}]
  %s2 = inlined_call_operand.vmem [shape: s32[16,1], index: 2, kind: input, shape index: {}]
  %s3 = inlined_call_operand.hbm [shape: f32[16,128], index: 3, kind: output, shape index: {0}]
  %s4 = inlined_call_operand.hbm [shape: f32[16,128], index: 4, kind: output, shape index: {1}]
  %s5 = inlined_call_operand.hbm [shape: f32[16,128], index: 5, kind: output, shape index: {2}]
  %6 = xla_tuple %s3, %s4, %s5
  %s7 = sld [smem:[#allocation0]]
  $region73: #{tpu_custom_call.1} parent=0
    _
  %s9 = ssub.s32 1, %s7
  %s10 = scalar_select 0, %s9, %s7
  $region1: #{tpu_custom_call.1} parent=0
    #allocation5 [shape = 'u8[8192]{0}', space=vmem, size = 0x2000, scoped, tag = 'input window, operand 1']
    #allocation6 [shape = 's32[2]{0}', space=sflag, size = 0x8, scoped, tag = 'scoped memory for tpu_custom_call.1']
    #allocation7 [shape = 's32[2]{0}', space=sflag, size = 0x8, scoped, tag = 'scoped memory for tpu_custom_call.1']
    #allocation8 [shape = 'u8[8192]{0}', space=vmem, size = 0x2000, scoped, tag = 'output window, operand 0']
    #allocation9 [shape = 'u8[8192]{0}', space=vmem, size = 0x2000, scoped, tag = 'output window, operand 1']
    #allocation10 [shape = 's32[2]{0}', space=sflag, size = 0x8, scoped, tag = 'scoped memory for tpu_custom_call.1']
    #allocation11 [shape = 'u8[8192]{0}', space=vmem, size = 0x2000, scoped, tag = 'output window, operand 2']
    %11 = vsyncpa [#allocation6], 0
    %s12 = scalar_lea.sflag [#allocation6], 1
    %13 = vsyncpa %s12, 0
    %14 = vsyncpa [#allocation7], 0
    %s15 = scalar_lea.sflag [#allocation7], 1
    %16 = vsyncpa %s15, 0
    %17 = vsyncpa [#allocation10], 0
    %s18 = scalar_lea.sflag [#allocation10], 1
    %19 = vsyncpa %s18, 0
    loop: start=0, step=1, limit=4
    $region2: #{tpu_custom_call.1} parent=1 // loop_pre_header
      _
    $region3: #{tpu_custom_call.1} parent=1 // loop_header
      %s21 = sphi 0, %s25
      %p22 = scmp.ge.s32.totalorder %s21, 4
      %s28 = sphi 0, %s40
      %s29 = sphi 0, %s36
      %s30 = sphi 0, %s28
      %s31 = sphi 0, %s29
      %s32 = sphi 0, %s30
      %s33 = sphi 0, %s31
      %s45 = sphi 0, %s47
      %s48 = sphi 0, %s45
      %s49 = sphi 0, %s48
      %s65 = sphi 0, %s49
      %s73 = sphi 0, %s75
      %s76 = sphi 0, %s73
      %s77 = sphi 0, %s76
      %s93 = sphi 0, %s77
      %s101 = sphi 0, %s103
      %s104 = sphi 0, %s101
      %s105 = sphi 0, %s104
      %s121 = sphi 0, %s105
      %s127 = sphi 0, %s129
      %s130 = sphi 0, %s127
      %s131 = sphi 0, %s130
      %s147 = sphi 0, %s131
      %s153 = sphi 0, %s155
      %s156 = sphi 0, %s153
      %s157 = sphi 0, %s156
      %s173 = sphi 0, %s157
      %s179 = sphi 0, %s181
      %s182 = sphi 0, %s179
      %s183 = sphi 0, %s182
      %s199 = sphi 0, %s183
    $region4: #{tpu_custom_call.1} parent=1 // loop_header_branch
      %24 = sbr.rel (%p22) target = $region8
    $region5: #{tpu_custom_call.1} parent=1 // loop_body
      %s26 = ssub.s32 %s21, 1
      %s27 = ssub.s32 %s21, 2
      %s34 = sadd.s32 1, %s29
      %p35 = scmp.ge.s32.totalorder %s34, 1
      %s36 = scalar_select %p35, 0, %s34
      %s37 = sadd.s32 1, %s28
      %s38 = scalar_select %p35, %s37, %s28
      %p39 = scmp.ge.s32.totalorder %s38, 2
      %s40 = scalar_select %p39, 0, %s38
      %s41 = sadd.s32 %s28, %s29
      %s42 = sadd.s32 %s40, %s36
      %s43 = ssub.s32 %s41, %s42
      %p44 = scmp.eq.s32.totalorder %s43, 0
      %s46 = sadd.s32 %s45, 1
      %s47 = scalar_select %p44, %s45, %s46
      %p50 = pneg %p44
      %p51 = scmp.eq.s32.totalorder %s21, 1
      %p52 = por %p50, %p51
      %p53 = scmp.ne.s32.totalorder %s45, %s48
      %p54 = scmp.eq.s32.totalorder %s21, 0
      %p55 = por %p53, %p54
      %p56 = scmp.ne.s32.totalorder %s45, %s48
      %p57 = scmp.eq.s32.totalorder %s26, 1
      %p58 = por %p56, %p57
      %p59 = scmp.ne.s32.totalorder %s48, %s49
      %p60 = scmp.eq.s32.totalorder %s26, 0
      %p61 = por %p59, %p60
      %p62 = scmp.ne.s32.totalorder %s48, %s49
      %p63 = scmp.eq.s32.totalorder %s27, 1
      %p64 = por %p62, %p63
      %p66 = scmp.ne.s32.totalorder %s49, %s65
      %p67 = scmp.eq.s32.totalorder %s27, 0
      %p68 = por %p66, %p67
      %s69 = sadd.s32 %s28, %s29
      %s70 = sadd.s32 %s40, %s36
      %s71 = ssub.s32 %s69, %s70
      %p72 = scmp.eq.s32.totalorder %s71, 0
      %s74 = sadd.s32 %s73, 1
      %s75 = scalar_select %p72, %s73, %s74
      %p78 = pneg %p72
      %p79 = scmp.eq.s32.totalorder %s21, 1
      %p80 = por %p78, %p79
      %p81 = scmp.ne.s32.totalorder %s73, %s76
      %p82 = scmp.eq.s32.totalorder %s21, 0
      %p83 = por %p81, %p82
      %p84 = scmp.ne.s32.totalorder %s73, %s76
      %p85 = scmp.eq.s32.totalorder %s26, 1
      %p86 = por %p84, %p85
      %p87 = scmp.ne.s32.totalorder %s76, %s77
      %p88 = scmp.eq.s32.totalorder %s26, 0
      %p89 = por %p87, %p88
      %p90 = scmp.ne.s32.totalorder %s76, %s77
      %p91 = scmp.eq.s32.totalorder %s27, 1
      %p92 = por %p90, %p91
      %p94 = scmp.ne.s32.totalorder %s77, %s93
      %p95 = scmp.eq.s32.totalorder %s27, 0
      %p96 = por %p94, %p95
      %s97 = sadd.s32 %s28, %s29
      %s98 = sadd.s32 %s40, %s36
      %s99 = ssub.s32 %s97, %s98
      %p100 = scmp.eq.s32.totalorder %s99, 0
      %s102 = sadd.s32 %s101, 1
      %s103 = scalar_select %p100, %s101, %s102
      %p106 = pneg %p100
      %p107 = scmp.eq.s32.totalorder %s21, 1
      %p108 = por %p106, %p107
      %p109 = scmp.ne.s32.totalorder %s101, %s104
      %p110 = scmp.eq.s32.totalorder %s21, 0
      %p111 = por %p109, %p110
      %p112 = scmp.ne.s32.totalorder %s101, %s104
      %p113 = scmp.eq.s32.totalorder %s26, 1
      %p114 = por %p112, %p113
      %p115 = scmp.ne.s32.totalorder %s104, %s105
      %p116 = scmp.eq.s32.totalorder %s26, 0
      %p117 = por %p115, %p116
      %p118 = scmp.ne.s32.totalorder %s104, %s105
      %p119 = scmp.eq.s32.totalorder %s27, 1
      %p120 = por %p118, %p119
      %p122 = scmp.ne.s32.totalorder %s105, %s121
      %p123 = scmp.eq.s32.totalorder %s27, 0
      %p124 = por %p122, %p123
      %s125 = ssub.s32 %s28, %s40
      %p126 = scmp.eq.s32.totalorder %s125, 0
      %s128 = sadd.s32 %s127, 1
      %s129 = scalar_select %p126, %s127, %s128
      %p132 = pneg %p126
      %p133 = scmp.eq.s32.totalorder %s21, 1
      %p134 = por %p132, %p133
      %p135 = scmp.ne.s32.totalorder %s127, %s130
      %p136 = scmp.eq.s32.totalorder %s21, 0
      %p137 = por %p135, %p136
      %p138 = scmp.ne.s32.totalorder %s127, %s130
      %p139 = scmp.eq.s32.totalorder %s26, 1
      %p140 = por %p138, %p139
      %p141 = scmp.ne.s32.totalorder %s130, %s131
      %p142 = scmp.eq.s32.totalorder %s26, 0
      %p143 = por %p141, %p142
      %p144 = scmp.ne.s32.totalorder %s130, %s131
      %p145 = scmp.eq.s32.totalorder %s27, 1
      %p146 = por %p144, %p145
      %p148 = scmp.ne.s32.totalorder %s131, %s147
      %p149 = scmp.eq.s32.totalorder %s27, 0
      %p150 = por %p148, %p149
      %s151 = ssub.s32 %s28, %s40
      %p152 = scmp.eq.s32.totalorder %s151, 0
      %s154 = sadd.s32 %s153, 1
      %s155 = scalar_select %p152, %s153, %s154
      %p158 = pneg %p152
      %p159 = scmp.eq.s32.totalorder %s21, 1
      %p160 = por %p158, %p159
      %p161 = scmp.ne.s32.totalorder %s153, %s156
      %p162 = scmp.eq.s32.totalorder %s21, 0
      %p163 = por %p161, %p162
      %p164 = scmp.ne.s32.totalorder %s153, %s156
      %p165 = scmp.eq.s32.totalorder %s26, 1
      %p166 = por %p164, %p165
      %p167 = scmp.ne.s32.totalorder %s156, %s157
      %p168 = scmp.eq.s32.totalorder %s26, 0
      %p169 = por %p167, %p168
      %p170 = scmp.ne.s32.totalorder %s156, %s157
      %p171 = scmp.eq.s32.totalorder %s27, 1
      %p172 = por %p170, %p171
      %p174 = scmp.ne.s32.totalorder %s157, %s173
      %p175 = scmp.eq.s32.totalorder %s27, 0
      %p176 = por %p174, %p175
      %s177 = ssub.s32 %s28, %s40
      %p178 = scmp.eq.s32.totalorder %s177, 0
      %s180 = sadd.s32 %s179, 1
      %s181 = scalar_select %p178, %s179, %s180
      %p184 = pneg %p178
      %p185 = scmp.eq.s32.totalorder %s21, 1
      %p186 = por %p184, %p185
      %p187 = scmp.ne.s32.totalorder %s179, %s182
      %p188 = scmp.eq.s32.totalorder %s21, 0
      %p189 = por %p187, %p188
      %p190 = scmp.ne.s32.totalorder %s179, %s182
      %p191 = scmp.eq.s32.totalorder %s26, 1
      %p192 = por %p190, %p191
      %p193 = scmp.ne.s32.totalorder %s182, %s183
      %p194 = scmp.eq.s32.totalorder %s26, 0
      %p195 = por %p193, %p194
      %p196 = scmp.ne.s32.totalorder %s182, %s183
      %p197 = scmp.eq.s32.totalorder %s27, 1
      %p198 = por %p196, %p197
      %p200 = scmp.ne.s32.totalorder %s183, %s199
      %p201 = scmp.eq.s32.totalorder %s27, 0
      %p202 = por %p200, %p201
      %p203 = scmp.le.s32.totalorder 1, %s21
      %p204 = scmp.lt.s32.totalorder %s21, 3
      %p205 = pnand %p203, %p204
      %p206 = pneg %p205
      // Predicated region
      $region9: #{tpu_custom_call.1} parent=5 // pred_check
        _
      $region10: #{tpu_custom_call.1} parent=5 // pred_check_branch
        %208 = sbr.rel (%p205) target = $region12
      $region11: #{tpu_custom_call.1} parent=5 // pred_region
        %s209 = ssub.s32 %s21, 1
      $region12: #{tpu_custom_call.1} parent=5 // pred_fallthru
        _
      %p210 = scmp.lt.s32.totalorder %s21, 2
      // Predicated region
      $region13: #{tpu_custom_call.1} parent=5 // pred_check
        %p211 = pneg %p210
      $region14: #{tpu_custom_call.1} parent=5 // pred_check_branch
        %213 = sbr.rel (%p211) target = $region16
      $region15: #{tpu_custom_call.1} parent=5 // pred_region
        // Predicated region
        $region17: #{tpu_custom_call.1} parent=15 // pred_check
          %p214 = pneg %p55
        $region18: #{tpu_custom_call.1} parent=15 // pred_check_branch
          %216 = sbr.rel (%p214) target = $region20
        $region19: #{tpu_custom_call.1} parent=15 // pred_region
          %s217 = sadd.s32 %s28, %s29
          %p218 = scmp.lt.s32.totalorder %s217, 1
          %s219 = scalar_select %p218, %s217, 1
          %s220 = smul.addr %s219, 8
          %s221 = scalar_lea.vmem %s0, %s220
          %s222 = sadd.s32 %s28, %s29
        $region20: #{tpu_custom_call.1} parent=15 // pred_fallthru
          _
        // Predicated region
        $region21: #{tpu_custom_call.1} parent=15 // pred_check
          %p223 = pneg %p83
        $region22: #{tpu_custom_call.1} parent=15 // pred_check_branch
          %225 = sbr.rel (%p223) target = $region24
        $region23: #{tpu_custom_call.1} parent=15 // pred_region
          %s226 = sand.u32 %s73, 1
          %s227 = scalar_lea.sflag [#allocation6], %s226
          %s228 = sand.u32 %s73, 1
          %s229 = smul.addr %s228, 8
          %s230 = scalar_lea.vmem [#allocation5], %s229
          %s231 = sadd.s32 %s28, %s29
          %s233 = ssub.s32 128, 128
          %234 = vsyncadd %s227, %s233
          %s235 = smul.addr %s231, 128
          %s236 = scalar_lea.hbm %s1, %s235
          %s238 = sshll.u32 %s230, 4
          %s239 = int_to_ptr.vmem [resolvable:$true] %s238
          %241 = dma.hbm_to_vmem [thread:$0]  %s236, 128, %s239, %s227
        $region24: #{tpu_custom_call.1} parent=15 // pred_fallthru
          _
        // Predicated region
        $region25: #{tpu_custom_call.1} parent=15 // pred_check
          %p242 = pneg %p111
        $region26: #{tpu_custom_call.1} parent=15 // pred_check_branch
          %244 = sbr.rel (%p242) target = $region28
        $region27: #{tpu_custom_call.1} parent=15 // pred_region
          %s245 = sadd.s32 %s28, %s29
          %p246 = scmp.lt.s32.totalorder %s245, 1
          %s247 = scalar_select %p246, %s245, 1
          %s248 = smul.addr %s247, 8
          %s249 = scalar_lea.vmem %s2, %s248
          %s250 = sadd.s32 %s28, %s29
        $region28: #{tpu_custom_call.1} parent=15 // pred_fallthru
          _
      $region16: #{tpu_custom_call.1} parent=5 // pred_fallthru
        _
      %p251 = scmp.le.s32.totalorder 1, %s21
      %p252 = scmp.lt.s32.totalorder %s21, 3
      %p253 = pnand %p251, %p252
      %p254 = pneg %p253
      // Predicated region
      $region29: #{tpu_custom_call.1} parent=5 // pred_check
        _
      $region30: #{tpu_custom_call.1} parent=5 // pred_check_branch
        %256 = sbr.rel (%p253) target = $region32
      $region31: #{tpu_custom_call.1} parent=5 // pred_region
        %s257 = ssub.s32 %s21, 1
        %s258 = sand.u32 %s76, 1
        %s259 = scalar_lea.sflag [#allocation6], %s258
        %s260 = sand.u32 %s76, 1
        %s261 = smul.addr %s260, 8
        %s262 = scalar_lea.vmem [#allocation5], %s261
        // Predicated region
        $region33: #{tpu_custom_call.1} parent=31 // pred_check
          %p263 = pneg %p89
        $region34: #{tpu_custom_call.1} parent=31 // pred_check_branch
          %265 = sbr.rel (%p263) target = $region36
        $region35: #{tpu_custom_call.1} parent=31 // pred_region
          %266 = dma.done %s259, 128
        $region36: #{tpu_custom_call.1} parent=31 // pred_fallthru
          _
        %s267 = sadd.s32 %s30, %s31
        %p268 = scmp.lt.s32.totalorder %s267, 1
        %s269 = scalar_select %p268, %s267, 1
        %s270 = smul.addr %s269, 8
        %s271 = scalar_lea.vmem %s0, %s270
        %p272 = pneg %p61
        %p273 = pneg %p58
        %s274 = sand.u32 %s76, 1
        %s275 = scalar_lea.sflag [#allocation6], %s274
        %s276 = sand.u32 %s76, 1
        %s277 = smul.addr %s276, 8
        %s278 = scalar_lea.vmem [#allocation5], %s277
        %p279 = pneg %p89
        %p280 = pneg %p86
        %s281 = sadd.s32 %s30, %s31
        %p282 = scmp.lt.s32.totalorder %s281, 1
        %s283 = scalar_select %p282, %s281, 1
        %s284 = smul.addr %s283, 8
        %s285 = scalar_lea.vmem %s2, %s284
        %p286 = pneg %p117
        %p287 = pneg %p114
        %p288 = pneg %p143
        %p289 = pneg %p140
        %s290 = sand.u32 %s130, 1
        %s291 = scalar_lea.sflag [#allocation7], %s290
        %s292 = sand.u32 %s130, 1
        %s293 = smul.addr %s292, 8
        %s294 = scalar_lea.vmem [#allocation8], %s293
        %p295 = pneg %p169
        %p296 = pneg %p166
        %s297 = sand.u32 %s26, 1
        %s298 = scalar_lea.sflag [#allocation10], %s297
        %s299 = sand.u32 %s156, 1
        %s300 = smul.addr %s299, 8
        %s301 = scalar_lea.vmem [#allocation9], %s300
        %p302 = pneg %p195
        %p303 = pneg %p192
        %s304 = sand.u32 %s26, 1
        %s305 = scalar_lea.sflag [#allocation10], %s304
        %s306 = sand.u32 %s182, 1
        %s307 = smul.addr %s306, 8
        %s308 = scalar_lea.vmem [#allocation11], %s307
        %s309 = sadd.s32 %s30, %s31
        %p310 = scmp.lt.s32.totalorder %s309, 1
        %s311 = scalar_select %p310, %s309, 1
        %s312 = smul.addr %s311, 8
        %s313 = scalar_lea.vmem %s0, %s312
        %s314 = sadd.s32 %s30, %s31
        %s315 = sadd.s32 %s30, %s31
        %s316 = sadd.s32 %s30, %s31
        %p317 = scmp.lt.s32.totalorder %s316, 1
        %s318 = scalar_select %p317, %s316, 1
        %s319 = smul.addr %s318, 8
        %s320 = scalar_lea.vmem %s2, %s319
        %s321 = sadd.s32 %s30, %s31
        %p322 = scmp.eq.s32.totalorder %s31, 0
        // Predicated region
        $region37: #{tpu_custom_call.1} parent=31 // pred_check
          %p323 = pneg %p322
        $region38: #{tpu_custom_call.1} parent=31 // pred_check_branch
          %325 = sbr.rel (%p323) target = $region40
        $region39: #{tpu_custom_call.1} parent=31 // pred_region
          %vm326 = vcmask 0
          %327 = vst.msk [vmem:[#allocation2] sm:$0x1] %vm326, 0.0
          %328 = vst.msk [vmem:[#allocation3] sm:$0x1] %vm326, 0.0
          %329 = vst.msk [vmem:[#allocation4] sm:$0x1] %vm326, 0.0
        $region40: #{tpu_custom_call.1} parent=31 // pred_fallthru
          _
        %v330 = vld [vmem:[%s313] sm:$0xff]
        %v331 = vld [vmem:[%s262] sm:$0xff]
        %v332 = vld [vmem:[%s320] sm:$0xff]
        %vm333 = vcmp.ne.s32.totalorder %v332, 2
        %v334 = vsel %vm333, 1, 0
        %v335 = vcvt.s32.f32 %v334
        %336 = vmax.xlane.f32.xlu0 %v330
        %v337 = vpop.xlane.xlu0 %336
        %338 = vmax.xlane.f32.xlu0 %v331
        %v339 = vpop.xlane.xlu0 %338
        %v340 = vsub.f32 %v331, %v339
        %v341 = vmul.f32 %v340, 0.33333334
        %v342 = vmul.f32 %v341, 1.442695
        %v343 = vpow.pop %v342
        %v344 = vsub.f32 %v331, %v330
        %v345 = vmul.f32 %v343, %v344
        %346 = vadd.xlane.f32.xlu0 %v345
        %v347 = vpop.xlane.xlu0 %346
        %348 = vadd.xlane.f32.xlu0 %v343
        %v349 = vpop.xlane.xlu0 %348
        %v350 = vsub.f32 %v330, %v337
        %v351 = vmul.f32 %v350, 0.33333334
        %v352 = vmul.f32 %v351, 1.442695
        %v353 = vpow.pop %v352
        %354 = vadd.xlane.f32.xlu0 %v353
        %v355 = vpop.xlane.xlu0 %354
        %v356 = vmul.f32 %v353, %v353
        %v357 = vmul.f32 %v356, %v353
        %358 = vadd.xlane.f32.xlu0 %v357
        %v359 = vpop.xlane.xlu0 %358
        %v360 = vmul.f32 %v337, 0.33333334
        %v361 = vlog2.pop %v355
        %v362 = vmul.f32 %v361, 0.6931472
        %v363 = vadd.f32 %v360, %v362
        %v364 = vmul.f32 %v339, 0.33333334
        %v365 = vlog2.pop %v349
        %v366 = vmul.f32 %v365, 0.6931472
        %v367 = vadd.f32 %v364, %v366
        %v368 = vlog2.pop %v359
        %v369 = vmul.f32 %v368, 0.6931472
        %v370 = vadd.f32 %v337, %v369
        %v371 = vmul.f32 %v347, 0.33333334
        %v372 = vrcp.pop %v349
        %v373 = vmul.f32 %v371, %v372
        %v374 = vadd.f32 %v373, %v363
        %v375 = vsub.f32 %v374, %v367
        %v376 = vlaneseq
        %v377 = vand.u32 %v376, 127
        %378 = vset.pattern.permute.xlu0 0
        %379 = vperm.xlu0 %378, %v332
        %v380 = vpop.permute.xlu0 %379
        %vm381 = vcmp.eq.s32.totalorder %v377, %v380
        %v382 = vsel %vm381, %v330, 0.0
        %383 = vadd.xlane.f32.xlu0 %v382
        %v384 = vpop.xlane.xlu0 %383
        %385 = vadd.xlane.f32.xlu0 %v330
        %v386 = vpop.xlane.xlu0 %385
        %v387 = vmul.f32 %v386, 0.0078125
        %v388 = vsub.f32 %v370, %v384
        %v389 = vsub.f32 %v370, %v387
        %v390 = vmul.f32 %v388, 0.9
        %v391 = vmul.f32 %v389, 0.1
        %v392 = vadd.f32 %v390, %v391
        %v393 = vld [vmem:[#allocation2] sm:$0x1]
        %v394 = vmul.f32 %v375, %v335
        %vm395 = vcmask 7168
        %v396 = vsel %vm395, %v394, 0.0
        %397 = vadd.xlane.f32.xlu0 %v396
        %v398 = vpop.xlane.xlu0 %397
        %v399 = vrot.slane %v398, 4
        %v400 = vadd.f32 %v398, %v399
        %v401 = vrot.slane %v400, 2
        %v402 = vadd.f32 %v400, %v401
        %v403 = vrot.slane %v402, 1
        %v404 = vadd.f32 %v402, %v403
        %s405 = vtos %v404
        %v406 = vstv %s405
        %v407 = vadd.f32 %v393, %v406
        %vm408 = vcmask 0
        %409 = vst.msk [vmem:[#allocation2] sm:$0x1] %vm408, %v407
        %v410 = vld [vmem:[#allocation3] sm:$0x1]
        %v411 = vmul.f32 %v392, %v335
        %v412 = vsel %vm395, %v411, 0.0
        %413 = vadd.xlane.f32.xlu0 %v412
        %v414 = vpop.xlane.xlu0 %413
        %v415 = vrot.slane %v414, 4
        %v416 = vadd.f32 %v414, %v415
        %v417 = vrot.slane %v416, 2
        %v418 = vadd.f32 %v416, %v417
        %v419 = vrot.slane %v418, 1
        %v420 = vadd.f32 %v418, %v419
        %s421 = vtos %v420
        %v422 = vstv %s421
        %v423 = vadd.f32 %v410, %v422
        %424 = vst.msk [vmem:[#allocation3] sm:$0x1] %vm408, %v423
        %v425 = vld [vmem:[#allocation4] sm:$0x1]
        %v426 = vsel %vm395, %v335, 0.0
        %427 = vadd.xlane.f32.xlu0 %v426
        %v428 = vpop.xlane.xlu0 %427
        %v429 = vrot.slane %v428, 4
        %v430 = vadd.f32 %v428, %v429
        %v431 = vrot.slane %v430, 2
        %v432 = vadd.f32 %v430, %v431
        %v433 = vrot.slane %v432, 1
        %v434 = vadd.f32 %v432, %v433
        %s435 = vtos %v434
        %v436 = vstv %s435
        %v437 = vadd.f32 %v425, %v436
        %438 = vst.msk [vmem:[#allocation4] sm:$0x1] %vm408, %v437
        // Predicated region
        $region41: #{tpu_custom_call.1} parent=31 // pred_check
          %p439 = pneg %p322
        $region42: #{tpu_custom_call.1} parent=31 // pred_check_branch
          %441 = sbr.rel (%p439) target = $region44
        $region43: #{tpu_custom_call.1} parent=31 // pred_region
          %v442 = vld [vmem:[#allocation2] sm:$0x1]
          %v444 = vlaneseq
          %v445 = vshrl.u32 %v444, 7
          %v446 = vsub.s32 0, %v445
          %v447 = vrot.slane %v442, %v446
          %448 = vset.pattern.permute.xlu0 0
          %449 = vperm.xlu0 %448, %v447
          %v450 = vpop.permute.xlu0 %449
          %452 = vst [vmem:[%s294] sm:$0xff] %v450
          %v453 = vld [vmem:[#allocation3] sm:$0x1]
          %v455 = vlaneseq
          %v456 = vshrl.u32 %v455, 7
          %v457 = vsub.s32 0, %v456
          %v458 = vrot.slane %v453, %v457
          %459 = vset.pattern.permute.xlu0 0
          %460 = vperm.xlu0 %459, %v458
          %v461 = vpop.permute.xlu0 %460
          %463 = vst [vmem:[%s301] sm:$0xff] %v461
          %v464 = vld [vmem:[#allocation4] sm:$0x1]
          %v466 = vlaneseq
          %v467 = vshrl.u32 %v466, 7
          %v468 = vsub.s32 0, %v467
          %v469 = vrot.slane %v464, %v468
          %470 = vset.pattern.permute.xlu0 0
          %471 = vperm.xlu0 %470, %v469
          %v472 = vpop.permute.xlu0 %471
          %474 = vst [vmem:[%s308] sm:$0xff] %v472
        $region44: #{tpu_custom_call.1} parent=31 // pred_fallthru
          _
        %s475 = sand.u32 %s130, 1
        %s476 = scalar_lea.sflag [#allocation7], %s475
        %s477 = sand.u32 %s130, 1
        %s478 = smul.addr %s477, 8
        %s479 = scalar_lea.vmem [#allocation8], %s478
        %s480 = sand.u32 %s26, 1
        %s481 = scalar_lea.sflag [#allocation10], %s480
        %s482 = sand.u32 %s156, 1
        %s483 = smul.addr %s482, 8
        %s484 = scalar_lea.vmem [#allocation9], %s483
        %s485 = sand.u32 %s26, 1
        %s486 = scalar_lea.sflag [#allocation10], %s485
        %s487 = sand.u32 %s182, 1
        %s488 = smul.addr %s487, 8
        %s489 = scalar_lea.vmem [#allocation11], %s488
        // Predicated region
        $region45: #{tpu_custom_call.1} parent=31 // pred_check
          %p490 = pneg %p140
        $region46: #{tpu_custom_call.1} parent=31 // pred_check_branch
          %492 = sbr.rel (%p490) target = $region48
        $region47: #{tpu_custom_call.1} parent=31 // pred_region
          %s494 = ssub.s32 128, 128
          %495 = vsyncadd %s476, %s494
          %s496 = smul.addr %s30, 128
          %s497 = scalar_lea.hbm %s3, %s496
          %s499 = sshll.u32 %s479, 4
          %s500 = int_to_ptr.vmem [resolvable:$true] %s499
          %502 = dma.vmem_to_hbm [thread:$0]  %s500, 128, %s497, %s476
        $region48: #{tpu_custom_call.1} parent=31 // pred_fallthru
          _
        // Predicated region
        $region49: #{tpu_custom_call.1} parent=31 // pred_check
          %p503 = pneg %p166
        $region50: #{tpu_custom_call.1} parent=31 // pred_check_branch
          %505 = sbr.rel (%p503) target = $region52
        $region51: #{tpu_custom_call.1} parent=31 // pred_region
          %s507 = ssub.s32 128, 128
          %508 = vsyncadd %s481, %s507
          %s509 = smul.addr %s30, 128
          %s510 = scalar_lea.hbm %s4, %s509
          %s512 = sshll.u32 %s484, 4
          %s513 = int_to_ptr.vmem [resolvable:$true] %s512
          %515 = dma.vmem_to_hbm [thread:$0]  %s513, 128, %s510, %s481
        $region52: #{tpu_custom_call.1} parent=31 // pred_fallthru
          _
        // Predicated region
        $region53: #{tpu_custom_call.1} parent=31 // pred_check
          %p516 = pneg %p192
        $region54: #{tpu_custom_call.1} parent=31 // pred_check_branch
          %518 = sbr.rel (%p516) target = $region56
        $region55: #{tpu_custom_call.1} parent=31 // pred_region
          %s520 = ssub.s32 128, 128
          %521 = vsyncadd %s486, %s520
          %s522 = smul.addr %s30, 128
          %s523 = scalar_lea.hbm %s5, %s522
          %s525 = sshll.u32 %s489, 4
          %s526 = int_to_ptr.vmem [resolvable:$true] %s525
          %528 = dma.vmem_to_hbm [thread:$0]  %s526, 128, %s523, %s486
        $region56: #{tpu_custom_call.1} parent=31 // pred_fallthru
          _
      $region32: #{tpu_custom_call.1} parent=5 // pred_fallthru
        _
      %p529 = scmp.le.s32.totalorder 2, %s21
      // Predicated region
      $region57: #{tpu_custom_call.1} parent=5 // pred_check
        %p530 = pneg %p529
      $region58: #{tpu_custom_call.1} parent=5 // pred_check_branch
        %532 = sbr.rel (%p530) target = $region60
      $region59: #{tpu_custom_call.1} parent=5 // pred_region
        %s533 = ssub.s32 %s21, 2
        // Predicated region
        $region61: #{tpu_custom_call.1} parent=59 // pred_check
          %p534 = pneg %p146
        $region62: #{tpu_custom_call.1} parent=59 // pred_check_branch
          %536 = sbr.rel (%p534) target = $region64
        $region63: #{tpu_custom_call.1} parent=59 // pred_region
          %s537 = sand.u32 %s131, 1
          %s538 = scalar_lea.sflag [#allocation7], %s537
          %s539 = sand.u32 %s131, 1
          %s540 = smul.addr %s539, 8
          %s541 = scalar_lea.vmem [#allocation8], %s540
          %542 = dma.done %s538, 128
        $region64: #{tpu_custom_call.1} parent=59 // pred_fallthru
          _
        // Predicated region
        $region65: #{tpu_custom_call.1} parent=59 // pred_check
          %p543 = pneg %p172
        $region66: #{tpu_custom_call.1} parent=59 // pred_check_branch
          %545 = sbr.rel (%p543) target = $region68
        $region67: #{tpu_custom_call.1} parent=59 // pred_region
          %s546 = sand.u32 %s27, 1
          %s547 = scalar_lea.sflag [#allocation10], %s546
          %s548 = sand.u32 %s157, 1
          %s549 = smul.addr %s548, 8
          %s550 = scalar_lea.vmem [#allocation9], %s549
          %551 = dma.done %s547, 128
        $region68: #{tpu_custom_call.1} parent=59 // pred_fallthru
          _
        // Predicated region
        $region69: #{tpu_custom_call.1} parent=59 // pred_check
          %p552 = pneg %p198
        $region70: #{tpu_custom_call.1} parent=59 // pred_check_branch
          %554 = sbr.rel (%p552) target = $region72
        $region71: #{tpu_custom_call.1} parent=59 // pred_region
          %s555 = sand.u32 %s27, 1
          %s556 = scalar_lea.sflag [#allocation10], %s555
          %s557 = sand.u32 %s183, 1
          %s558 = smul.addr %s557, 8
          %s559 = scalar_lea.vmem [#allocation11], %s558
          %560 = dma.done %s556, 128
        $region72: #{tpu_custom_call.1} parent=59 // pred_fallthru
          _
      $region60: #{tpu_custom_call.1} parent=5 // pred_fallthru
        _
    $region6: #{tpu_custom_call.1} parent=1 // loop_footer
      %s25 = sadd.s32 1, %s21
    $region7: #{tpu_custom_call.1} parent=1 // loop_footer_branch
      %20 = sbr.rel target = $region3
    $region8: #{tpu_custom_call.1} parent=1 // loop_exit
      _
    %561 = vsyncpa [#allocation6], 1
    %s562 = scalar_lea.sflag [#allocation6], 1
    %563 = vsyncpa %s562, 1
    %564 = vsyncpa [#allocation7], 1
    %s565 = scalar_lea.sflag [#allocation7], 1
    %566 = vsyncpa %s565, 1
    %567 = vsyncpa [#allocation10], 1
    %s568 = scalar_lea.sflag [#allocation10], 1
    %569 = vsyncpa %s568, 1

</llo_original>
